<compile_context>
chip_gen: v7x
topology: tpu7x:2x2x1
jax: 0.10.0
libtpu: 0.0.40
codegen_flags: <defaults>
</compile_context>

<pallas_src>
import math

import jax
import jax.numpy as jnp
from jax.experimental import pallas as pl
from jax.experimental.pallas import tpu as pltpu


def _cdiv(a, b):
    return -(-a // b)


def _round_up(x, m):
    return _cdiv(x, m) * m


def _divisor_tile(padded, target, gran):
    """Largest multiple of `gran` that divides `padded` and is <= target."""
    best = gran
    d = gran
    limit = min(padded, max(target, gran))
    while d <= limit:
        if padded % d == 0:
            best = d
        d += gran
    return best


# ----------------------------- kernels --------------------------------------


def _linear_kernel_acc(x_ref, w_ref, b_ref, o_ref, acc_ref):
    """(tm, tn) output tile; f32 scratch accumulation, non-f32 output dtype."""
    k = pl.program_id(2)

    @pl.when(k == 0)
    def _():
        acc_ref[...] = jnp.zeros_like(acc_ref)

    acc_ref[...] += jnp.dot(x_ref[...], w_ref[...],
                            preferred_element_type=jnp.float32)

    @pl.when(k == pl.num_programs(2) - 1)
    def _():
        o_ref[...] = (acc_ref[...] + b_ref[...]).astype(o_ref.dtype)


def _linear_kernel_f32(x_ref, w_ref, b_ref, o_ref):
    """(tm, tn) output tile; accumulate directly in the resident f32 output."""
    k = pl.program_id(2)

    @pl.when(k == 0)
    def _():
        o_ref[...] = jnp.zeros_like(o_ref)

    o_ref[...] += jnp.dot(x_ref[...], w_ref[...],
                          preferred_element_type=jnp.float32)

    @pl.when(k == pl.num_programs(2) - 1)
    def _():
        o_ref[...] += b_ref[...]


def _linear_kernel_single(x_ref, w_ref, b_ref, o_ref):
    """Whole problem in one VMEM-resident block (small-shape fast path)."""
    o_ref[...] = (jnp.dot(x_ref[...], w_ref[...],
                          preferred_element_type=jnp.float32)
                  + b_ref[...]).astype(o_ref.dtype)


# --------------------------- host-side wrappers ------------------------------


def prepare_linear_params(weight, bias=None, *, compute_dtype=jnp.bfloat16):
    """One-time weight preprocessing, hoisted out of the forward hot path.

    weight: (out_dim, in_dim) in PyTorch Linear layout.
    Returns the transposed, 128-padded, compute_dtype weight of shape (Kp, Np)
    and a 128-padded f32 bias of shape (1, Np).
    """
    out_dim, in_dim = weight.shape
    Kp = _round_up(in_dim, 128)
    Np = _round_up(out_dim, 128)
    w_p = jnp.pad(weight.T, ((0, Kp - in_dim), (0, Np - out_dim)))
    w_p = w_p.astype(compute_dtype)
    b = jnp.zeros((out_dim,), jnp.float32) if bias is None else bias.astype(jnp.float32)
    b_p = jnp.pad(b, (0, Np - out_dim)).reshape(1, Np)
    return {
        "w_padded": w_p,
        "b_padded": b_p,
        "in_dim": in_dim,
        "out_dim": out_dim,
        "compute_dtype": compute_dtype,
    }


def linear_norm_apply(x, prepared, *, tm=512, tn=512, tk=1024,
                      small_path_bytes=2 << 20):
    """y = x @ W.T + b using pre-prepared weight/bias (prepare_linear_params)."""
    w_p = prepared["w_padded"]
    b_p = prepared["b_padded"]
    in_dim = prepared["in_dim"]
    out_dim = prepared["out_dim"]
    compute_dtype = prepared["compute_dtype"]

    *lead, x_in = x.shape
    assert x_in == in_dim, (x_in, in_dim)
    Kp, Np = w_p.shape
    out_dtype = x.dtype
    out_itemsize = jnp.dtype(out_dtype).itemsize
    itemsize = jnp.dtype(compute_dtype).itemsize

    M = math.prod(lead) if lead else 1
    x2 = x.reshape(M, in_dim)

    # ---- Small-shape fast path: whole problem resident in VMEM, no grid -----
    total_bytes = (M * Kp + Kp * Np) * itemsize + M * Np * out_itemsize
    if total_bytes <= small_path_bytes:
        Mp = _round_up(M, 8)
        x_p = jnp.pad(x2, ((0, Mp - M), (0, Kp - in_dim))).astype(compute_dtype)
        out = pl.pallas_call(
            _linear_kernel_single,
            out_shape=jax.ShapeDtypeStruct((Mp, Np), out_dtype),
        )(x_p, w_p, b_p)
        y = out if (Mp == M and Np == out_dim) else out[:M, :out_dim]
        return y.reshape(*lead, out_dim)

    # ---- Tiled path ----------------------------------------------------------
    # K / N tiles: 128-multiples that divide the 128-padded dims exactly.
    tk = _divisor_tile(Kp, tk, 128)
    tn = _divisor_tile(Np, tn, 128)
    nk = Kp // tk
    nn = Np // tn

    # M tile: multiple of 16 (bf16 sublane packing); pad only as much as needed.
    M16 = _round_up(M, 16)
    nm = max(1, _cdiv(M16, tm))
    tm = _round_up(_cdiv(M16, nm), 16)
    # Keep both TensorCores busy (megacore / v7x) if the parallel output grid
    # would otherwise collapse to a single step.
    if nm * nn == 1 and M16 >= 32:
        nm = 2
        tm = _round_up(_cdiv(M16, nm), 16)
    Mp = nm * tm

    x_p = jnp.pad(x2, ((0, Mp - M), (0, Kp - in_dim))).astype(compute_dtype)

    use_acc_scratch = out_dtype != jnp.float32
    kernel = _linear_kernel_acc if use_acc_scratch else _linear_kernel_f32
    scratch_shapes = ([pltpu.VMEM((tm, tn), jnp.float32)]
                      if use_acc_scratch else [])

    # Double-buffered per-step VMEM footprint; cap well below v7x's 64 MiB.
    footprint = (2 * (tm * tk + tk * tn) * itemsize   # x / w input buffers
                 + 2 * tm * tn * out_itemsize         # output buffers
                 + 2 * tn * 4)                        # bias buffers
    if use_acc_scratch:
        footprint += tm * tn * 4
    vmem_limit = min(max(32 << 20, (footprint * 3) // 2), 48 << 20)

    out = pl.pallas_call(
        kernel,
        out_shape=jax.ShapeDtypeStruct((Mp, Np), out_dtype),
        grid=(nm, nn, nk),
        in_specs=[
            pl.BlockSpec((tm, tk), lambda i, j, k: (i, k)),   # activations
            pl.BlockSpec((tk, tn), lambda i, j, k: (k, j)),   # weights (K, N)
            pl.BlockSpec((1, tn), lambda i, j, k: (0, j)),    # bias (f32)
        ],
        out_specs=pl.BlockSpec((tm, tn), lambda i, j, k: (i, j)),
        scratch_shapes=scratch_shapes,
        compiler_params=pltpu.CompilerParams(
            dimension_semantics=("parallel", "parallel", "arbitrary"),
            vmem_limit_bytes=int(vmem_limit)),
    )(x_p, w_p, b_p)

    y = out if (Mp == M and Np == out_dim) else out[:M, :out_dim]
    return y.reshape(*lead, out_dim)


def linear_norm_forward(x, weight, bias=None, *, compute_dtype=jnp.bfloat16,
                        **kwargs):
    """One-shot convenience wrapper (prepares the weight on every call)."""
    prepared = prepare_linear_params(weight, bias, compute_dtype=compute_dtype)
    return linear_norm_apply(x, prepared, **kwargs)


def init_linear_norm_params(key, in_dim, out_dim, bias=True,
                            w_init_gain="linear"):
    """Mirrors LinearNorm.__init__: xavier_uniform_ weight, default Linear bias."""
    gains = {"linear": 1.0, "relu": math.sqrt(2.0), "tanh": 5.0 / 3.0,
             "sigmoid": 1.0}
    gain = gains[w_init_gain]
    wk, bk = jax.random.split(key)
    bound = gain * math.sqrt(6.0 / (in_dim + out_dim))        # xavier_uniform_
    weight = jax.random.uniform(wk, (out_dim, in_dim), jnp.float32,
                                minval=-bound, maxval=bound)
    params = {"weight": weight}
    if bias:
        # torch.nn.Linear default bias init: U(-1/sqrt(fan_in), 1/sqrt(fan_in))
        b_bound = 1.0 / math.sqrt(in_dim)
        params["bias"] = jax.random.uniform(bk, (out_dim,), jnp.float32,
                                            minval=-b_bound, maxval=b_bound)
    else:
        params["bias"] = None
    return params


if __name__ == "__main__":
    key = jax.random.PRNGKey(0)
    k1, k2, k3, k4 = jax.random.split(key, 4)

    # --- Case 1: tiny (B, T, C) projection -> small-shape fast path ----------
    B, T, in_dim, out_dim = 2, 16, 80, 96
    params = init_linear_norm_params(k1, in_dim, out_dim, bias=True,
                                     w_init_gain="linear")
    x = jax.random.normal(k2, (B, T, in_dim), jnp.float32)
    prepared = prepare_linear_params(params["weight"], params["bias"])
    y = linear_norm_apply(x, prepared)
    jax.block_until_ready(y)
    assert y.shape == (B, T, out_dim), y.shape
    assert y.dtype == x.dtype
    y_ref = x @ params["weight"].T + params["bias"]
    err1 = float(jnp.max(jnp.abs(y - y_ref)))
    assert err1 < 1e-1, err1

    # --- Case 2: force the tiled path (small tiles), bf16 input/output -------
    B2, T2, in2, out2 = 4, 64, 256, 384
    params2 = init_linear_norm_params(k3, in2, out2, bias=True,
                                      w_init_gain="relu")
    x2 = jax.random.normal(k4, (B2, T2, in2), jnp.float32).astype(jnp.bfloat16)
    prepared2 = prepare_linear_params(params2["weight"], params2["bias"])
    y2 = linear_norm_apply(x2, prepared2, tm=128, tn=128, tk=128,
                           small_path_bytes=0)
    jax.block_until_ready(y2)
    assert y2.shape == (B2, T2, out2), y2.shape
    assert y2.dtype == jnp.bfloat16
    y2_ref = x2.astype(jnp.float32) @ params2["weight"].T + params2["bias"]
    err2 = float(jnp.max(jnp.abs(y2.astype(jnp.float32) - y2_ref)))
    assert err2 < 2e-1, err2

    print("KERNEL_OK")
</pallas_src>

<mosaic_0001>
module attributes {stable_mosaic.version = 11 : i64} {
  func.func @_linear_kernel_single(%arg0: memref<32x128xbf16, #tpu.memory_space<vmem>>, %arg1: memref<128x128xbf16, #tpu.memory_space<vmem>>, %arg2: memref<1x128xf32, #tpu.memory_space<vmem>>, %arg3: memref<32x128xf32, #tpu.memory_space<vmem>>) attributes {dimension_semantics = [], scalar_prefetch = 0 : i64, scratch_operands = 0 : i64, tpu.core_type = #tpu.core_type<tc>} {
    %c0 = arith.constant 0 : index
    %c0_0 = arith.constant 0 : index
    %0 = vector.load %arg0[%c0, %c0_0] : memref<32x128xbf16, #tpu.memory_space<vmem>>, vector<32x128xbf16>
    %c0_1 = arith.constant 0 : index
    %c0_2 = arith.constant 0 : index
    %1 = vector.load %arg1[%c0_1, %c0_2] : memref<128x128xbf16, #tpu.memory_space<vmem>>, vector<128x128xbf16>
    %cst = arith.constant dense<0.000000e+00> : vector<32x128xf32>
    %2 = tpu.matmul %0, %1, %cst {dimension_numbers = #tpu.dot_dimension_numbers<[1], [0], [0], [1], [0, 0, 1, 1], [], []>} : vector<32x128xbf16>, vector<128x128xbf16>, vector<32x128xf32> -> vector<32x128xf32>
    %c0_3 = arith.constant 0 : index
    %c0_4 = arith.constant 0 : index
    %3 = vector.load %arg2[%c0_3, %c0_4] : memref<1x128xf32, #tpu.memory_space<vmem>>, vector<1x128xf32>
    %4 = vector.broadcast %3 : vector<1x128xf32> to vector<32x128xf32>
    %5 = arith.addf %2, %4 : vector<32x128xf32>
    %c0_5 = arith.constant 0 : index
    %c0_6 = arith.constant 0 : index
    %6 = vector.load %arg3[%c0_5, %c0_6] : memref<32x128xf32, #tpu.memory_space<vmem>>, vector<32x128xf32>
    tpu.vector_store %arg3[%c0_5, %c0_6], %5 {strides = array<i32>} : memref<32x128xf32, #tpu.memory_space<vmem>>, vector<32x128xf32>,
    return
  }
}

</mosaic_0001>

<llo_original>
// kernel: tpu_custom_call.1
$region0: #{tpu_custom_call.1}
  #allocation0 [shape = 'u32[]', space=smem, size = 0x4, offset = 0x4, fixed_abs, tag = 'smem constant byte address 0x4 - core index']
  #allocation1 [shape = 'u32[144,128]{1,0:T(1,128)}', space=vmem, size = 0x12000, scoped, tag = 'internal scratch']
  %s0 = inlined_call_operand.hbm [shape: bf16[32,128], index: 0, kind: input, shape index: {}]
  %s1 = inlined_call_operand.hbm [shape: bf16[128,128], index: 1, kind: input, shape index: {}]
  %s2 = inlined_call_operand.vmem [shape: f32[1,128], index: 2, kind: input, shape index: {}]
  %s3 = inlined_call_operand.hbm [shape: f32[32,128], index: 3, kind: output, shape index: {}]
  %s4 = sld [smem:[#allocation0]]
  $region30: #{tpu_custom_call.1} parent=0
    _
  %s6 = ssub.s32 1, %s4
  %s7 = scalar_select 0, %s6, %s4
  $region1: #{tpu_custom_call.1} parent=0
    #allocation2 [shape = 'u8[8192]{0}', space=vmem, size = 0x2000, scoped, tag = 'input window, operand 0, single buffered']
    #allocation3 [shape = 's32[1]{0}', space=sflag, size = 0x4, scoped, tag = 'scoped memory for tpu_custom_call.1']
    #allocation4 [shape = 's32[1]{0}', space=sflag, size = 0x4, scoped, tag = 'scoped memory for tpu_custom_call.1']
    #allocation5 [shape = 'u8[32768]{0}', space=vmem, size = 0x8000, scoped, tag = 'input window, operand 1, single buffered']
    #allocation6 [shape = 's32[1]{0}', space=sflag, size = 0x4, scoped, tag = 'scoped memory for tpu_custom_call.1']
    #allocation7 [shape = 'u8[16384]{0}', space=vmem, size = 0x4000, scoped, tag = 'output window, operand 0, single buffered']
    %8 = vsyncpa [#allocation3], 0
    %9 = vsyncpa [#allocation6], 0
    %10 = vsyncpa [#allocation4], 0
    // Predicated region
    $region2: #{tpu_custom_call.1} parent=1 // pred_check
      _
    $region3: #{tpu_custom_call.1} parent=1 // pred_check_branch
      %12 = sbr.rel (0) target = $region5
    $region4: #{tpu_custom_call.1} parent=1 // pred_region
      %s14 = ssub.s32 256, 256
      %15 = vsyncadd [#allocation3], %s14
      %s16 = sshll.u32 [#allocation2], 4
      %s17 = int_to_ptr.vmem [resolvable:$true] %s16
      %22 = dma.hbm_to_vmem [thread:$0]  %s0, 256, %s17, [#allocation3], 64, 64, 4
    $region5: #{tpu_custom_call.1} parent=1 // pred_fallthru
      _
    // Predicated region
    $region6: #{tpu_custom_call.1} parent=1 // pred_check
      _
    $region7: #{tpu_custom_call.1} parent=1 // pred_check_branch
      %24 = sbr.rel (0) target = $region9
    $region8: #{tpu_custom_call.1} parent=1 // pred_region
      %s26 = ssub.s32 1024, 1024
      %27 = vsyncadd [#allocation6], %s26
      %s28 = sshll.u32 [#allocation5], 4
      %s29 = int_to_ptr.vmem [resolvable:$true] %s28
      %34 = dma.hbm_to_vmem [thread:$0]  %s1, 1024, %s29, [#allocation6], 64, 64, 4
    $region9: #{tpu_custom_call.1} parent=1 // pred_fallthru
      _
    // Predicated region
    $region10: #{tpu_custom_call.1} parent=1 // pred_check
      _
    $region11: #{tpu_custom_call.1} parent=1 // pred_check_branch
      %36 = sbr.rel (0) target = $region13
    $region12: #{tpu_custom_call.1} parent=1 // pred_region
      _
    $region13: #{tpu_custom_call.1} parent=1 // pred_fallthru
      _
    // Predicated region
    $region14: #{tpu_custom_call.1} parent=1 // pred_check
      _
    $region15: #{tpu_custom_call.1} parent=1 // pred_check_branch
      %38 = sbr.rel (0) target = $region17
    $region16: #{tpu_custom_call.1} parent=1 // pred_region
      %39 = dma.done [#allocation3], 256
    $region17: #{tpu_custom_call.1} parent=1 // pred_fallthru
      _
    // Predicated region
    $region18: #{tpu_custom_call.1} parent=1 // pred_check
      _
    $region19: #{tpu_custom_call.1} parent=1 // pred_check_branch
      %41 = sbr.rel (0) target = $region21
    $region20: #{tpu_custom_call.1} parent=1 // pred_region
      %42 = dma.done [#allocation6], 1024
    $region21: #{tpu_custom_call.1} parent=1 // pred_fallthru
      _
    %v44 = vld [vmem:[#allocation2] sm:$0xf]
    %v45 = vld [vmem:[#allocation2 + $0x4] sm:$0xf]
    %v46 = vld [vmem:[#allocation2 + $0x8] sm:$0xf]
    %v47 = vld [vmem:[#allocation2 + $0xc] sm:$0xf]
    %v48 = vld [vmem:[#allocation5] sm:$0xf]
    %v49 = vld [vmem:[#allocation5 + $0x4] sm:$0xf]
    %v50 = vld [vmem:[#allocation5 + $0x8] sm:$0xf]
    %v51 = vld [vmem:[#allocation5 + $0xc] sm:$0xf]
    %v52 = vld [vmem:[#allocation5 + $0x10] sm:$0xf]
    %v53 = vld [vmem:[#allocation5 + $0x14] sm:$0xf]
    %v54 = vld [vmem:[#allocation5 + $0x18] sm:$0xf]
    %v55 = vld [vmem:[#allocation5 + $0x1c] sm:$0xf]
    %v56 = vld [vmem:[#allocation5 + $0x20] sm:$0xf]
    %v57 = vld [vmem:[#allocation5 + $0x24] sm:$0xf]
    %v58 = vld [vmem:[#allocation5 + $0x28] sm:$0xf]
    %v59 = vld [vmem:[#allocation5 + $0x2c] sm:$0xf]
    %v60 = vld [vmem:[#allocation5 + $0x30] sm:$0xf]
    %v61 = vld [vmem:[#allocation5 + $0x34] sm:$0xf]
    %v62 = vld [vmem:[#allocation5 + $0x38] sm:$0xf]
    %v63 = vld [vmem:[#allocation5 + $0x3c] sm:$0xf]
    %v64 = vld [vmem:[%s2] sm:$0x1]
    %v66 = vlaneseq
    %v67 = vshrl.u32 %v66, 7
    %v68 = vsub.s32 0, %v67
    %v69 = vrot.slane %v64, %v68
    %v75 = vunpack.c.l.b16 %v44
    %v76 = vunpack.c.l.b16 %v45
    %v77 = vunpack.c.l.b16 %v46
    %v78 = vunpack.c.l.b16 %v47
    %v79 = vpack.c.b16 %v76, %v75
    %v80 = vpack.c.b16 %v78, %v77
    %v99 = vunpack.c.l.b16 %v48
    %v100 = vunpack.c.l.b16 %v49
    %v101 = vunpack.c.l.b16 %v50
    %v102 = vunpack.c.l.b16 %v51
    %v103 = vunpack.c.l.b16 %v52
    %v104 = vunpack.c.l.b16 %v53
    %v105 = vunpack.c.l.b16 %v54
    %v106 = vunpack.c.l.b16 %v55
    %v107 = vunpack.c.l.b16 %v56
    %v108 = vunpack.c.l.b16 %v57
    %v109 = vunpack.c.l.b16 %v58
    %v110 = vunpack.c.l.b16 %v59
    %v111 = vunpack.c.l.b16 %v60
    %v112 = vunpack.c.l.b16 %v61
    %v113 = vunpack.c.l.b16 %v62
    %v114 = vunpack.c.l.b16 %v63
    %v115 = vpack.c.b16 %v100, %v99
    %v116 = vpack.c.b16 %v102, %v101
    %v117 = vpack.c.b16 %v104, %v103
    %v118 = vpack.c.b16 %v106, %v105
    %v119 = vpack.c.b16 %v108, %v107
    %v120 = vpack.c.b16 %v110, %v109
    %v121 = vpack.c.b16 %v112, %v111
    %v122 = vpack.c.b16 %v114, %v113
    %131 = vmatprep.subr.bf16.mxu0 0
    %132 = vmatpush1.bf16.msra.mxu0 %v115
    %133 = vmatprep.subr.bf16.mxu0 0
    %134 = vmatpush1.bf16.msra.mxu0 %v116
    %135 = vmatprep.subr.bf16.mxu0 0
    %136 = vmatpush1.bf16.msra.mxu0 %v117
    %137 = vmatprep.subr.bf16.mxu0 0
    %138 = vmatpush1.bf16.msra.mxu0 %v118
    %139 = vmatprep.subr.bf16.mxu0 0
    %140 = vmatpush1.bf16.msra.mxu0 %v119
    %141 = vmatprep.subr.bf16.mxu0 0
    %142 = vmatpush1.bf16.msra.mxu0 %v120
    %143 = vmatprep.subr.bf16.mxu0 0
    %144 = vmatpush1.bf16.msra.mxu0 %v121
    %145 = vmatprep.subr.bf16.mxu0 0
    %146 = vmatpush1.bf16.msra.mxu0 %v122
    %147 = vmatprep.subr.bf16.mxu0 0
    %148 = vmatpush1.bf16.msra.mxu0 0
    %149 = vmatprep.subr.bf16.mxu0 0
    %150 = vmatpush1.bf16.msra.mxu0 0
    %151 = vmatprep.subr.bf16.mxu0 0
    %152 = vmatpush1.bf16.msra.mxu0 0
    %153 = vmatprep.subr.bf16.mxu0 0
    %154 = vmatpush1.bf16.msra.mxu0 0
    %155 = vmatprep.subr.bf16.mxu0 0
    %156 = vmatpush1.bf16.msra.mxu0 0
    %157 = vmatprep.subr.bf16.mxu0 0
    %158 = vmatpush1.bf16.msra.mxu0 0
    %159 = vmatprep.subr.bf16.mxu0 0
    %160 = vmatpush1.bf16.msra.mxu0 0
    %161 = vmatprep.subr.bf16.mxu0 0
    %162 = vmatpush1.bf16.msra.mxu0 0
    %163 = vmatprep.mubr.bf16.mxu0 0
    %164 = vmatmul.mubr.bf16.gmra.mrb[0].mxu0 %v79
    %v165 = vpop.f32.mrb[0].mxu0
    %v166 = vadd.f32 %v69, %v165
    %v167 = vpop.f32.mrb[0].mxu0
    %v168 = vpop.f32.mrb[0].mxu0
    %v169 = vadd.f32 %v69, %v168
    %v170 = vpop.f32.mrb[0].mxu0
    %171 = vmatprep.mubr.bf16.mxu0 0
    %172 = vmatmul.mubr.bf16.gmra.mrb[0].mxu0 %v80
    %v173 = vpop.f32.mrb[0].mxu0
    %v174 = vadd.f32 %v69, %v173
    %v175 = vpop.f32.mrb[0].mxu0
    %v176 = vpop.f32.mrb[0].mxu0
    %v177 = vadd.f32 %v69, %v176
    %v178 = vpop.f32.mrb[0].mxu0
    %179 = vdwg.mxu0
    %180 = vst [vmem:[#allocation7] sm:$0xff] %v166
    %181 = vst [vmem:[#allocation7 + $0x8] sm:$0xff] %v169
    %182 = vst [vmem:[#allocation7 + $0x10] sm:$0xff] %v174
    %183 = vst [vmem:[#allocation7 + $0x18] sm:$0xff] %v177
    // Predicated region
    $region22: #{tpu_custom_call.1} parent=1 // pred_check
      _
    $region23: #{tpu_custom_call.1} parent=1 // pred_check_branch
      %185 = sbr.rel (0) target = $region25
    $region24: #{tpu_custom_call.1} parent=1 // pred_region
      %s187 = ssub.s32 512, 512
      %188 = vsyncadd [#allocation4], %s187
      %s189 = sshll.u32 [#allocation7], 4
      %s190 = int_to_ptr.vmem [resolvable:$true] %s189
      %195 = dma.vmem_to_hbm [thread:$0]  %s190, 512, %s3, [#allocation4], 128, 128, 8
    $region25: #{tpu_custom_call.1} parent=1 // pred_fallthru
      _
    // Predicated region
    $region26: #{tpu_custom_call.1} parent=1 // pred_check
      _
    $region27: #{tpu_custom_call.1} parent=1 // pred_check_branch
      %197 = sbr.rel (0) target = $region29
    $region28: #{tpu_custom_call.1} parent=1 // pred_region
      %198 = dma.done [#allocation4], 512
    $region29: #{tpu_custom_call.1} parent=1 // pred_fallthru
      _
    %199 = vsyncpa [#allocation3], 1
    %200 = vsyncpa [#allocation6], 1
    %201 = vsyncpa [#allocation4], 1

</llo_original>
